<compile_context>
chip_gen: v7x
topology: tpu7x:2x2x1
jax: 0.10.0
libtpu: 0.0.40
codegen_flags: <defaults>
</compile_context>

<pallas_src>
import functools
import random

import jax
import jax.numpy as jnp
from jax.experimental import pallas as pl
from jax.experimental.pallas import tpu as pltpu


def _round_up(x, m):
    return ((x + m - 1) // m) * m


def _default_vmem_limit():
    # Size the scoped VMEM limit per generation instead of a hard 64 MiB:
    # leave ~25% headroom for compiler-internal scratch / pipeline buffers.
    try:
        cap = pltpu.get_tpu_info().vmem_capacity_bytes
    except Exception:
        cap = 128 * 1024 * 1024
    return min(int(cap * 3 // 4), 100 * 1024 * 1024)


_VMEM_LIMIT = _default_vmem_limit()


# ---------------------------------------------------------------------------
# Kernel 1: avg-pool (native [B, C, HW] layout, no transpose) + Linear
#           (BatchNorm runs outside on the tiny [B, E] result -> global stats)
# ---------------------------------------------------------------------------
def _pool_linear_kernel(v_ref, w_ref, b_ref, o_ref):
    # v_ref: [Bt, C, HW]; the 1/HW pooling scale is folded into w_ref, so this is
    # just a lane reduce (XLU) + one MXU matmul per batch block.
    pooled = jnp.sum(v_ref[...], axis=2)                                    # [Bt, C]
    o_ref[...] = (jnp.dot(pooled.astype(jnp.bfloat16), w_ref[...],
                          preferred_element_type=jnp.float32) + b_ref[...])


def pool_linear(v_bc_hw, w_scaled, b):
    B, C, HW = v_bc_hw.shape
    E = w_scaled.shape[1]
    if B % 8 == 0:
        Bt = next(bt for bt in (64, 32, 16, 8) if B % bt == 0)
    else:
        Bt = B  # small / ragged batch: single block (avoids a padding pass over v)
    return pl.pallas_call(
        _pool_linear_kernel,
        out_shape=jax.ShapeDtypeStruct((B, E), jnp.float32),
        grid_spec=pltpu.PrefetchScalarGridSpec(
            num_scalar_prefetch=0,
            grid=(B // Bt,),
            in_specs=[pl.BlockSpec((Bt, C, HW), lambda i: (i, 0, 0)),
                      pl.BlockSpec((C, E), lambda i: (0, 0)),
                      pl.BlockSpec((1, E), lambda i: (0, 0))],
            out_specs=pl.BlockSpec((Bt, E), lambda i: (i, 0))),
        compiler_params=pltpu.CompilerParams(
            dimension_semantics=("parallel",),
            vmem_limit_bytes=_VMEM_LIMIT),
    )(v_bc_hw, w_scaled, b)


# ---------------------------------------------------------------------------
# Kernel 2: full-sequence single-layer LSTM (TextProcessor), one launch
#   - input projection hoisted into ONE matmul, result kept in bf16 VMEM scratch
#   - recurrence is a lax.fori_loop (bounded live ranges) doing only h @ W_hh
# ---------------------------------------------------------------------------
def _text_lstm_kernel(x_ref, wih_ref, whh_ref, b_ref, h_ref, c_ref, xw_sc,
                      *, T, B, hid):
    x = jnp.tanh(x_ref[...])                                                # [T*B, E]
    xw_sc[...] = (jnp.dot(x.astype(jnp.bfloat16), wih_ref[...],
                          preferred_element_type=jnp.float32)
                  + b_ref[...]).astype(jnp.bfloat16)                        # [T*B, 4H] bf16

    def step(t, carry):
        h, c = carry
        off = pl.multiple_of(t * B, 8)                                      # sublane-aligned
        gates = (xw_sc[pl.ds(off, B), :].astype(jnp.float32)
                 + jnp.dot(h.astype(jnp.bfloat16), whh_ref[...],
                           preferred_element_type=jnp.float32))             # [B, 4H] f32
        i = jax.nn.sigmoid(gates[:, 0 * hid:1 * hid])
        f = jax.nn.sigmoid(gates[:, 1 * hid:2 * hid])
        g = jnp.tanh(gates[:, 2 * hid:3 * hid])
        o = jax.nn.sigmoid(gates[:, 3 * hid:4 * hid])
        c = f * c + i * g
        h = o * jnp.tanh(c)
        return h, c

    zeros = jnp.zeros((B, hid), jnp.float32)
    h, c = jax.lax.fori_loop(0, T, step, (zeros, zeros))
    h_ref[...] = h
    c_ref[...] = c


def text_lstm(x_flat, wih_bf16, whh_bf16, bias, T, B, hid):
    # TODO(synk): for production batch sizes add a 'parallel' batch-block grid axis
    #             here too (v7x megacore); one invocation is fine at these shapes.
    return pl.pallas_call(
        functools.partial(_text_lstm_kernel, T=T, B=B, hid=hid),
        out_shape=(jax.ShapeDtypeStruct((B, hid), jnp.float32),
                   jax.ShapeDtypeStruct((B, hid), jnp.float32)),
        scratch_shapes=[pltpu.VMEM((T * B, 4 * hid), jnp.bfloat16)],
        compiler_params=pltpu.CompilerParams(vmem_limit_bytes=_VMEM_LIMIT),
    )(x_flat, wih_bf16, whh_bf16, bias)


# ---------------------------------------------------------------------------
# Kernel 3: fused teacher-forcing decode loop (DecoderRNN_IMGFeat), one launch
# ---------------------------------------------------------------------------
def _decoder_kernel(ut_ref,                               # [Tm1p+1] int32 (SMEM prefetch)
                    temb_ref, feat_ref, h0_ref, c0_ref,   # per-block inputs
                    wihf_ref, wfused_ref, b_ref, wout_ref, bout_ref,
                    *rest, hid, ts, v_real, vpad, use_greedy):
    if use_greedy:
        demb_ref, logits_ref, h_sc, c_sc, fp_sc, xin_sc = rest
    else:
        logits_ref, h_sc, c_sc, fp_sc = rest

    t_blk = pl.program_id(1)

    @pl.when(t_blk == 0)
    def _():
        h_sc[...] = h0_ref[...]
        c_sc[...] = c0_ref[...]
        # features @ W_ih[:E] (+ bias) is constant across steps -> compute once/block
        fp_sc[...] = jnp.dot(feat_ref[...].astype(jnp.bfloat16), wihf_ref[...],
                             preferred_element_type=jnp.float32) + b_ref[...]
        if use_greedy:
            xin_sc[...] = jnp.zeros_like(xin_sc)

    if use_greedy:
        lane_iota = jax.lax.broadcasted_iota(jnp.int32, (h_sc.shape[0], vpad), 1)

    for t in range(ts):  # static unroll over the small time tile (ts <= 8)
        gs = t_blk * ts + t

        if use_greedy:
            # xin_sc always holds this step's input embedding: either written here
            # (teacher forced) or by the greedy tail of the previous step.
            @pl.when(ut_ref[gs] > 0)
            def _():
                xin_sc[...] = temb_ref[t]
            x_emb = xin_sc[...]
        else:
            x_emb = temb_ref[t]                                             # [Bb, E] bf16

        # single fused input+recurrent matmul: [x_emb ; h] @ [W_ih_emb ; W_hh]
        xh = jnp.concatenate([x_emb, h_sc[...].astype(jnp.bfloat16)], axis=1)
        gates = fp_sc[...] + jnp.dot(xh, wfused_ref[...],
                                     preferred_element_type=jnp.float32)    # [Bb, 4H]
        i = jax.nn.sigmoid(gates[:, 0 * hid:1 * hid])
        f = jax.nn.sigmoid(gates[:, 1 * hid:2 * hid])
        g = jnp.tanh(gates[:, 2 * hid:3 * hid])
        o = jax.nn.sigmoid(gates[:, 3 * hid:4 * hid])
        c_new = f * c_sc[...] + i * g
        h_new = o * jnp.tanh(c_new)
        h_sc[...] = h_new
        c_sc[...] = c_new

        logits = jnp.dot(h_new.astype(jnp.bfloat16), wout_ref[...],
                         preferred_element_type=jnp.float32) + bout_ref[...]  # [Bb, Vp]
        logits_ref[t] = logits

        if use_greedy:
            # Only spend the vocab-wide argmax + embedding lookup when the NEXT
            # step is NOT teacher forced (ut has a trailing guard element == 1).
            @pl.when(ut_ref[gs + 1] == 0)
            def _():
                masked = jnp.where(lane_iota < v_real, logits, -1e30)
                mx = jnp.max(masked, axis=1, keepdims=True)
                cand = jnp.where(masked >= mx, lane_iota, vpad)
                idx = jnp.min(cand, axis=1, keepdims=True)                  # first max
                onehot = jnp.where(lane_iota == idx, 1.0, 0.0).astype(jnp.bfloat16)
                # TODO(synk): at production vocab sizes replace this one-hot MXU
                #             gather with per-row dynamic reads / a small DMA gather.
                xin_sc[...] = jnp.dot(onehot, demb_ref[...],
                                      preferred_element_type=jnp.float32
                                      ).astype(jnp.bfloat16)


def fused_decoder(use_teacher, temb, feat, h0, c0, wih_f, w_fused, bias,
                  wout, bout, demb, *, hid, v_real, ts, use_greedy):
    Tm1p, Bp, E = temb.shape
    Vp = wout.shape[1]
    nT = Tm1p // ts
    # Split batch into two blocks when possible so v7x megacore can shard the
    # 'parallel' batch axis across its 2 TensorCores.
    Bb = Bp // 2 if Bp % 16 == 0 else Bp
    nB = Bp // Bb

    args = [use_teacher, temb, feat, h0, c0, wih_f, w_fused, bias, wout, bout]
    if use_greedy:
        args.append(demb)

    def build(single_buffer):
        def rspec(shape):
            idx = lambda b, t, ut: (0,) * len(shape)
            if single_buffer:
                # constant index_map -> never re-DMA'd; single buffering halves the
                # VMEM footprint of the vocab-sized residents (critical on v7x).
                return pl.BlockSpec(shape, idx, pipeline_mode=pl.Buffered(1))
            return pl.BlockSpec(shape, idx)

        in_specs = [
            pl.BlockSpec((ts, Bb, E), lambda b, t, ut: (t, b, 0)),    # teacher embeddings
            pl.BlockSpec((Bb, E), lambda b, t, ut: (b, 0)),           # image features
            pl.BlockSpec((Bb, hid), lambda b, t, ut: (b, 0)),         # h0
            pl.BlockSpec((Bb, hid), lambda b, t, ut: (b, 0)),         # c0
            rspec((E, 4 * hid)),                                      # W_ih (features half)
            rspec((E + hid, 4 * hid)),                                # fused [W_ih_emb; W_hh]
            rspec((1, 4 * hid)),                                      # LSTM bias (ih + hh)
            rspec((hid, Vp)),                                         # out_w
            rspec((1, Vp)),                                           # out_b
        ]
        scratch = [pltpu.VMEM((Bb, hid), jnp.float32),                # h
                   pltpu.VMEM((Bb, hid), jnp.float32),                # c
                   pltpu.VMEM((Bb, 4 * hid), jnp.float32)]            # feat @ W_ih_f + b
        if use_greedy:
            in_specs.append(rspec((Vp, E)))                           # decoder embedding
            scratch.append(pltpu.VMEM((Bb, E), jnp.bfloat16))         # next-step input emb
        # TODO(synk): on v7x, wout/demb could additionally be stored in fp8 to halve
        #             their VMEM footprint (validate accuracy first).

        kernel = functools.partial(_decoder_kernel, hid=hid, ts=ts, v_real=v_real,
                                   vpad=Vp, use_greedy=use_greedy)
        grid_spec = pltpu.PrefetchScalarGridSpec(
            num_scalar_prefetch=1,
            grid=(nB, nT),
            in_specs=in_specs,
            out_specs=pl.BlockSpec((ts, Bb, Vp), lambda b, t, ut: (t, b, 0)),
            scratch_shapes=scratch)
        return pl.pallas_call(
            kernel,
            out_shape=jax.ShapeDtypeStruct((Tm1p, Bp, Vp), jnp.float32),
            grid_spec=grid_spec,
            compiler_params=pltpu.CompilerParams(
                dimension_semantics=("parallel", "arbitrary"),
                vmem_limit_bytes=_VMEM_LIMIT))

    try:
        return build(single_buffer=True)(*args)
    except Exception:
        # pl.Buffered(1) single-buffering unavailable on this jax/libtpu build ->
        # fall back to the default double-buffered resident weights.
        return build(single_buffer=False)(*args)


# ---------------------------------------------------------------------------
# Net.forward (JAX glue around the Pallas kernels)
# ---------------------------------------------------------------------------
def net_forward(params, v_feat, q, hashtag, teacher_forcing_ratio=0.5, py_rng=None):
    """v_feat: [B, C_vis, H, W] (stands in for ResNet50 layer4 output)
       q:      [B, T_q] int tokens; hashtag: [B, T_trg] int tokens."""
    if py_rng is None:
        py_rng = random.Random(0)

    B, C, Hs, Ws = v_feat.shape
    HW = Hs * Ws
    E = params["lin_w"].shape[1]
    hid = params["dec_whh"].shape[0]
    V = params["out_w"].shape[1]
    Bp = _round_up(B, 8)        # sublane tile for the recurrent kernels
    Vp = _round_up(V, 128)      # lane tile (lane-dense logit stores)
    f32, bf16 = jnp.float32, jnp.bfloat16

    # --- image branch: pool+linear kernel, then BatchNorm (batch stats) in XLA ---
    v_bc = v_feat.reshape(B, C, HW)                          # free reshape, no transpose
    w_pool = (params["lin_w"] * (1.0 / HW)).astype(bf16)     # fold 1/HW into the weight
    feat_lin = pool_linear(v_bc, w_pool, params["lin_b"])    # [B, E] f32
    mean = jnp.mean(feat_lin, axis=0, keepdims=True)
    var = jnp.mean((feat_lin - mean) ** 2, axis=0, keepdims=True)   # biased, BN train mode
    features = (params["bn_gamma"] * (feat_lin - mean)
                * jax.lax.rsqrt(var + 1e-5) + params["bn_beta"])

    # --- text branch: q.permute(1,0) -> embed -> tanh -> LSTM (kernel 2) ---
    q_tb = q.T                                                               # [T_q, B]
    T_q = q_tb.shape[0]
    q_emb = jnp.take(params["txt_emb"], q_tb, axis=0)                        # [T_q, B, E]
    q_emb = jnp.pad(q_emb, ((0, 0), (0, Bp - B), (0, 0)))                    # pad batch
    h0, c0 = text_lstm(q_emb.reshape(T_q * Bp, E),
                       params["txt_wih"].astype(bf16),
                       params["txt_whh"].astype(bf16),
                       params["txt_b"], T_q, Bp, hid)                        # [Bp, hid] x2

    # --- fused teacher-forcing decode loop (kernel 3) ---
    ht_tb = hashtag.T                                                        # [T_trg, B]
    T_trg = ht_tb.shape[0]
    Tm1 = T_trg - 1
    TS = min(Tm1, 8)                                                         # time tile
    Tm1p = _round_up(Tm1, TS)
    temb = jnp.take(params["dec_emb"], ht_tb[:Tm1], axis=0)                  # [Tm1, B, E]
    temb = jnp.pad(temb, ((0, Tm1p - Tm1), (0, Bp - B), (0, 0))).astype(bf16)
    feat_p = jnp.pad(features, ((0, Bp - B), (0, 0)))

    # teacher-force decisions (same RNG-consumption pattern as the PyTorch loop;
    # the final draw is unused there as well).  Padded/guard entries are 1 so no
    # greedy work runs for them and the in-kernel ut[s+1] lookahead never reads OOB.
    use_greedy = teacher_forcing_ratio < 1.0
    flags = [1]
    for t in range(1, T_trg):
        forced = 1 if py_rng.random() < teacher_forcing_ratio else 0
        if t <= T_trg - 2:
            flags.append(forced)
    flags += [1] * (Tm1p + 1 - len(flags))
    use_teacher = jnp.array(flags, jnp.int32)                                # [Tm1p+1]

    # decoder weights: features-half of W_ih separate (projected once), the
    # embedding-half fused with W_hh into one [E+hid, 4H] matmul operand.
    wih_f = params["dec_wih"][:E].astype(bf16)
    w_fused = jnp.concatenate([params["dec_wih"][E:], params["dec_whh"]],
                              axis=0).astype(bf16)
    wout_p = jnp.zeros((hid, Vp), f32).at[:, :V].set(params["out_w"]).astype(bf16)
    bout_p = jnp.zeros((1, Vp), f32).at[:, :V].set(params["out_b"])
    demb_p = (jnp.zeros((Vp, E), f32).at[:V].set(params["dec_emb"]).astype(bf16)
              if use_greedy else None)

    logits_p = fused_decoder(
        use_teacher, temb, feat_p, h0, c0, wih_f, w_fused, params["dec_b"],
        wout_p, bout_p, demb_p,
        hid=hid, v_real=V, ts=TS, use_greedy=use_greedy)                     # [Tm1p, Bp, Vp]

    outputs = jnp.concatenate(
        [jnp.zeros((1, B, V), f32), logits_p[:Tm1, :B, :V]], axis=0)         # row 0 zero
    return outputs


# ---------------------------------------------------------------------------
# Deterministic parameter setup + smoke test
# ---------------------------------------------------------------------------
def make_params(key, C_vis, E, hid, V_q, V_out):
    ks = jax.random.split(key, 10)
    s = 0.05
    return {
        # linear (cnn.fc.in_features -> dec_emb_size) + BatchNorm1d
        "lin_w": s * jax.random.normal(ks[0], (C_vis, E), jnp.float32),
        "lin_b": jnp.zeros((1, E), jnp.float32),
        "bn_gamma": jnp.ones((1, E), jnp.float32),
        "bn_beta": jnp.zeros((1, E), jnp.float32),
        # TextProcessor: embedding + LSTM(E -> hid), biases zeroed (module init)
        "txt_emb": s * jax.random.normal(ks[1], (V_q, E), jnp.float32),
        "txt_wih": s * jax.random.normal(ks[2], (E, 4 * hid), jnp.float32),
        "txt_whh": s * jax.random.normal(ks[3], (hid, 4 * hid), jnp.float32),
        "txt_b": jnp.zeros((1, 4 * hid), jnp.float32),
        # DecoderRNN_IMGFeat: embedding + LSTM(2E -> hid) + Linear(hid -> V_out)
        # (transposed PyTorch weight_ih/weight_hh, i-f-g-o gate packing, bias_ih+bias_hh
        #  pre-summed; dec_wih rows [:E] multiply features, rows [E:] the token embedding,
        #  matching torch.cat((features, embeddings), 2) order)
        "dec_emb": s * jax.random.normal(ks[4], (V_out, E), jnp.float32),
        "dec_wih": s * jax.random.normal(ks[5], (2 * E, 4 * hid), jnp.float32),
        "dec_whh": s * jax.random.normal(ks[6], (hid, 4 * hid), jnp.float32),
        "dec_b": s * jax.random.normal(ks[7], (1, 4 * hid), jnp.float32),
        "out_w": s * jax.random.normal(ks[8], (hid, V_out), jnp.float32),
        "out_b": jnp.zeros((1, V_out), jnp.float32),
    }


if __name__ == "__main__":
    B, C_VIS, HS, WS = 2, 128, 4, 4       # layer4-style feature map (scaled down)
    E = 128                               # dec_emb_size (prod 300 -> pad to 384)
    HID = 128                             # hidden_size (scaled from 512)
    V_Q, V_OUT = 64, 48                   # question vocab / hashtag vocab
    T_Q, T_TRG = 8, 6

    root = jax.random.PRNGKey(0)
    k_params, k_v, k_q, k_h = jax.random.split(root, 4)

    params = make_params(k_params, C_VIS, E, HID, V_Q, V_OUT)
    v_feat = jax.random.normal(k_v, (B, C_VIS, HS, WS), jnp.float32)
    q = jax.random.randint(k_q, (B, T_Q), 0, V_Q, jnp.int32)
    hashtag = jax.random.randint(k_h, (B, T_TRG), 0, V_OUT, jnp.int32)

    # Path 1: full teacher forcing -> greedy decode tail compiled out entirely.
    out_tf = net_forward(params, v_feat, q, hashtag,
                         teacher_forcing_ratio=1.0, py_rng=random.Random(0))
    out_tf = jax.block_until_ready(out_tf)
    assert out_tf.shape == (T_TRG, B, V_OUT)
    assert bool(jnp.all(jnp.isfinite(out_tf)))

    # Path 2: mixed teacher forcing -> gated in-kernel greedy argmax + embedding.
    out_mix = net_forward(params, v_feat, q, hashtag,
                          teacher_forcing_ratio=0.5, py_rng=random.Random(0))
    out_mix = jax.block_until_ready(out_mix)
    assert out_mix.shape == (T_TRG, B, V_OUT)
    assert bool(jnp.all(jnp.isfinite(out_mix)))

    print("KERNEL_OK")
</pallas_src>

<mosaic_0001>
module attributes {stable_mosaic.version = 11 : i64} {
  func.func @_pool_linear_kernel(%arg0: i32, %arg1: memref<2x128x16xf32, #tpu.memory_space<vmem>>, %arg2: memref<128x128xbf16, #tpu.memory_space<vmem>>, %arg3: memref<1x128xf32, #tpu.memory_space<vmem>>, %arg4: memref<2x128xf32, #tpu.memory_space<vmem>>) attributes {dimension_semantics = [#tpu.dimension_semantics<parallel>], iteration_bounds = array<i64: 1>, scalar_prefetch = 0 : i64, scratch_operands = 0 : i64, tpu.core_type = #tpu.core_type<tc>, window_params = [{transform_indices = @transform_0, window_bounds = array<i64: 2, 128, 16>}, {pipeline_mode = #tpu.pipeline_mode<synchronous>, transform_indices = @transform_1, window_bounds = array<i64: 128, 128>}, {pipeline_mode = #tpu.pipeline_mode<synchronous>, transform_indices = @transform_2, window_bounds = array<i64: 1, 128>}, {transform_indices = @transform_3, window_bounds = array<i64: 2, 128>}]} {
    %c0 = arith.constant 0 : index
    %c0_0 = arith.constant 0 : index
    %c0_1 = arith.constant 0 : index
    %0 = vector.load %arg1[%c0, %c0_0, %c0_1] : memref<2x128x16xf32, #tpu.memory_space<vmem>>, vector<2x128x16xf32>
    %cst = arith.constant dense<0.000000e+00> : vector<2x128xf32>
    %1 = vector.multi_reduction <add>, %0, %cst [2] : vector<2x128x16xf32> to vector<2x128xf32>
    %2 = arith.truncf %1 : vector<2x128xf32> to vector<2x128xbf16>
    %c0_2 = arith.constant 0 : index
    %c0_3 = arith.constant 0 : index
    %3 = vector.load %arg2[%c0_2, %c0_3] : memref<128x128xbf16, #tpu.memory_space<vmem>>, vector<128x128xbf16>
    %cst_4 = arith.constant dense<0.000000e+00> : vector<2x128xf32>
    %4 = tpu.matmul %2, %3, %cst_4 {dimension_numbers = #tpu.dot_dimension_numbers<[1], [0], [0], [1], [0, 0, 1, 1], [], []>} : vector<2x128xbf16>, vector<128x128xbf16>, vector<2x128xf32> -> vector<2x128xf32>
    %c0_5 = arith.constant 0 : index
    %c0_6 = arith.constant 0 : index
    %5 = vector.load %arg3[%c0_5, %c0_6] : memref<1x128xf32, #tpu.memory_space<vmem>>, vector<1x128xf32>
    %6 = vector.broadcast %5 : vector<1x128xf32> to vector<2x128xf32>
    %7 = arith.addf %4, %6 : vector<2x128xf32>
    %c0_7 = arith.constant 0 : index
    %c0_8 = arith.constant 0 : index
    %8 = vector.load %arg4[%c0_7, %c0_8] : memref<2x128xf32, #tpu.memory_space<vmem>>, vector<2x128xf32>
    tpu.vector_store %arg4[%c0_7, %c0_8], %7 {strides = array<i32>} : memref<2x128xf32, #tpu.memory_space<vmem>>, vector<2x128xf32>,
    return
  }
  func.func @transform_0(%arg0: i32) -> (i32, i32, i32) {
    %c0_i32 = arith.constant 0 : i32
    %c0_i32_0 = arith.constant 0 : i32
    %c0_i32_1 = arith.constant 0 : i32
    return %arg0, %c0_i32, %c0_i32_0 : i32, i32, i32
  }
  func.func @transform_1(%arg0: i32) -> (i32, i32) {
    %c0_i32 = arith.constant 0 : i32
    %c0_i32_0 = arith.constant 0 : i32
    %c0_i32_1 = arith.constant 0 : i32
    return %c0_i32, %c0_i32_0 : i32, i32
  }
  func.func @transform_2(%arg0: i32) -> (i32, i32) {
    %c0_i32 = arith.constant 0 : i32
    %c0_i32_0 = arith.constant 0 : i32
    %c0_i32_1 = arith.constant 0 : i32
    return %c0_i32, %c0_i32_0 : i32, i32
  }
  func.func @transform_3(%arg0: i32) -> (i32, i32) {
    %c0_i32 = arith.constant 0 : i32
    %c0_i32_0 = arith.constant 0 : i32
    return %arg0, %c0_i32 : i32, i32
  }
}

</mosaic_0001>

<llo_original>
// kernel: tpu_custom_call.1
$region0: #{tpu_custom_call.1}
  #allocation0 [shape = 'u32[]', space=smem, size = 0x4, offset = 0x4, fixed_abs, tag = 'smem constant byte address 0x4 - core index']
  #allocation1 [shape = 'u32[144,128]{1,0:T(1,128)}', space=vmem, size = 0x12000, scoped, tag = 'internal scratch']
  %s0 = inlined_call_operand.hbm [shape: f32[2,128,16], index: 0, kind: input, shape index: {}]
  %s1 = inlined_call_operand.hbm [shape: bf16[128,128], index: 1, kind: input, shape index: {}]
  %s2 = inlined_call_operand.hbm [shape: f32[1,128], index: 2, kind: input, shape index: {}]
  %s3 = inlined_call_operand.hbm [shape: f32[2,128], index: 3, kind: output, shape index: {}]
  %s4 = sld [smem:[#allocation0]]
  $region34: #{tpu_custom_call.1} parent=0
    _
  %s6 = ssub.s32 1, %s4
  %s7 = scalar_select 0, %s6, %s4
  $region1: #{tpu_custom_call.1} parent=0
    #allocation2 [shape = 'u8[131072]{0}', space=vmem, size = 0x20000, scoped, tag = 'input window, operand 0, single buffered']
    #allocation3 [shape = 's32[1]{0}', space=sflag, size = 0x4, scoped, tag = 'scoped memory for tpu_custom_call.1']
    #allocation4 [shape = 's32[1]{0}', space=sflag, size = 0x4, scoped, tag = 'scoped memory for tpu_custom_call.1']
    #allocation5 [shape = 'u8[32768]{0}', space=vmem, size = 0x8000, scoped, tag = 'input window, operand 1, single buffered']
    #allocation6 [shape = 's32[1]{0}', space=sflag, size = 0x4, scoped, tag = 'scoped memory for tpu_custom_call.1']
    #allocation7 [shape = 'u8[512]{0}', space=vmem, size = 0x400, scoped, tag = 'input window, operand 2, single buffered']
    #allocation8 [shape = 'u8[1024]{0}', space=vmem, size = 0x400, scoped, tag = 'output window, operand 0, single buffered']
    %8 = vsyncpa [#allocation3], 0
    %9 = vsyncpa [#allocation6], 0
    %10 = vsyncpa [#allocation4], 0
    // Predicated region
    $region2: #{tpu_custom_call.1} parent=1 // pred_check
      _
    $region3: #{tpu_custom_call.1} parent=1 // pred_check_branch
      %12 = sbr.rel (0) target = $region5
    $region4: #{tpu_custom_call.1} parent=1 // pred_region
      %s14 = ssub.s32 4096, 4096
      %15 = vsyncadd [#allocation3], %s14
      %s16 = sshll.u32 [#allocation2], 4
      %s17 = int_to_ptr.vmem [resolvable:$true] %s16
      %22 = dma.hbm_to_vmem [thread:$0]  %s0, 4096, %s17, [#allocation3], 128, 128, 8
    $region5: #{tpu_custom_call.1} parent=1 // pred_fallthru
      _
    // Predicated region
    $region6: #{tpu_custom_call.1} parent=1 // pred_check
      _
    $region7: #{tpu_custom_call.1} parent=1 // pred_check_branch
      %24 = sbr.rel (0) target = $region9
    $region8: #{tpu_custom_call.1} parent=1 // pred_region
      %s26 = ssub.s32 1024, 1024
      %27 = vsyncadd [#allocation6], %s26
      %s28 = sshll.u32 [#allocation5], 4
      %s29 = int_to_ptr.vmem [resolvable:$true] %s28
      %34 = dma.hbm_to_vmem [thread:$0]  %s1, 1024, %s29, [#allocation6], 64, 64, 4
    $region9: #{tpu_custom_call.1} parent=1 // pred_fallthru
      _
    // Predicated region
    $region10: #{tpu_custom_call.1} parent=1 // pred_check
      _
    $region11: #{tpu_custom_call.1} parent=1 // pred_check_branch
      %36 = sbr.rel (0) target = $region13
    $region12: #{tpu_custom_call.1} parent=1 // pred_region
      %s38 = ssub.s32 16, 16
      %39 = vsyncadd [#allocation6], %s38
      %s41 = sshll.u32 [#allocation7], 4
      %s42 = int_to_ptr.vmem [resolvable:$true] %s41
      %44 = dma.hbm_to_vmem [thread:$0]  %s2, 16, %s42, [#allocation6]
    $region13: #{tpu_custom_call.1} parent=1 // pred_fallthru
      _
    // Predicated region
    $region14: #{tpu_custom_call.1} parent=1 // pred_check
      _
    $region15: #{tpu_custom_call.1} parent=1 // pred_check_branch
      %46 = sbr.rel (0) target = $region17
    $region16: #{tpu_custom_call.1} parent=1 // pred_region
      %47 = dma.done [#allocation3], 4096
    $region17: #{tpu_custom_call.1} parent=1 // pred_fallthru
      _
    // Predicated region
    $region18: #{tpu_custom_call.1} parent=1 // pred_check
      _
    $region19: #{tpu_custom_call.1} parent=1 // pred_check_branch
      %49 = sbr.rel (0) target = $region21
    $region20: #{tpu_custom_call.1} parent=1 // pred_region
      %50 = dma.done [#allocation6], 1024
    $region21: #{tpu_custom_call.1} parent=1 // pred_fallthru
      _
    // Predicated region
    $region22: #{tpu_custom_call.1} parent=1 // pred_check
      _
    $region23: #{tpu_custom_call.1} parent=1 // pred_check_branch
      %52 = sbr.rel (0) target = $region25
    $region24: #{tpu_custom_call.1} parent=1 // pred_region
      %53 = dma.done [#allocation6], 16
    $region25: #{tpu_custom_call.1} parent=1 // pred_fallthru
      _
    %v55 = vld [vmem:[#allocation2] sm:$0xff]
    %v56 = vld [vmem:[#allocation2 + $0x8] sm:$0xff]
    %v57 = vld [vmem:[#allocation2 + $0x10] sm:$0xff]
    %v58 = vld [vmem:[#allocation2 + $0x18] sm:$0xff]
    %v59 = vld [vmem:[#allocation2 + $0x20] sm:$0xff]
    %v60 = vld [vmem:[#allocation2 + $0x28] sm:$0xff]
    %v61 = vld [vmem:[#allocation2 + $0x30] sm:$0xff]
    %v62 = vld [vmem:[#allocation2 + $0x38] sm:$0xff]
    %v63 = vld [vmem:[#allocation2 + $0x40] sm:$0xff]
    %v64 = vld [vmem:[#allocation2 + $0x48] sm:$0xff]
    %v65 = vld [vmem:[#allocation2 + $0x50] sm:$0xff]
    %v66 = vld [vmem:[#allocation2 + $0x58] sm:$0xff]
    %v67 = vld [vmem:[#allocation2 + $0x60] sm:$0xff]
    %v68 = vld [vmem:[#allocation2 + $0x68] sm:$0xff]
    %v69 = vld [vmem:[#allocation2 + $0x70] sm:$0xff]
    %v70 = vld [vmem:[#allocation2 + $0x78] sm:$0xff]
    %v71 = vld [vmem:[#allocation2 + $0x80] sm:$0xff]
    %v72 = vld [vmem:[#allocation2 + $0x88] sm:$0xff]
    %v73 = vld [vmem:[#allocation2 + $0x90] sm:$0xff]
    %v74 = vld [vmem:[#allocation2 + $0x98] sm:$0xff]
    %v75 = vld [vmem:[#allocation2 + $0xa0] sm:$0xff]
    %v76 = vld [vmem:[#allocation2 + $0xa8] sm:$0xff]
    %v77 = vld [vmem:[#allocation2 + $0xb0] sm:$0xff]
    %v78 = vld [vmem:[#allocation2 + $0xb8] sm:$0xff]
    %v79 = vld [vmem:[#allocation2 + $0xc0] sm:$0xff]
    %v80 = vld [vmem:[#allocation2 + $0xc8] sm:$0xff]
    %v81 = vld [vmem:[#allocation2 + $0xd0] sm:$0xff]
    %v82 = vld [vmem:[#allocation2 + $0xd8] sm:$0xff]
    %v83 = vld [vmem:[#allocation2 + $0xe0] sm:$0xff]
    %v84 = vld [vmem:[#allocation2 + $0xe8] sm:$0xff]
    %v85 = vld [vmem:[#allocation2 + $0xf0] sm:$0xff]
    %v86 = vld [vmem:[#allocation2 + $0xf8] sm:$0xff]
    %vm87 = vcmask 130048
    %v88 = vsel %vm87, %v55, 0.0
    %89 = vadd.xlane.f32.xlu0 %v88
    %v90 = vpop.xlane.xlu0 %89
    %v91 = vsel %vm87, %v56, 0.0
    %92 = vadd.xlane.f32.xlu0 %v91
    %v93 = vpop.xlane.xlu0 %92
    %v94 = vsel %vm87, %v57, 0.0
    %95 = vadd.xlane.f32.xlu0 %v94
    %v96 = vpop.xlane.xlu0 %95
    %v97 = vsel %vm87, %v58, 0.0
    %98 = vadd.xlane.f32.xlu0 %v97
    %v99 = vpop.xlane.xlu0 %98
    %v100 = vsel %vm87, %v59, 0.0
    %101 = vadd.xlane.f32.xlu0 %v100
    %v102 = vpop.xlane.xlu0 %101
    %v103 = vsel %vm87, %v60, 0.0
    %104 = vadd.xlane.f32.xlu0 %v103
    %v105 = vpop.xlane.xlu0 %104
    %v106 = vsel %vm87, %v61, 0.0
    %107 = vadd.xlane.f32.xlu0 %v106
    %v108 = vpop.xlane.xlu0 %107
    %v109 = vsel %vm87, %v62, 0.0
    %110 = vadd.xlane.f32.xlu0 %v109
    %v111 = vpop.xlane.xlu0 %110
    %v112 = vsel %vm87, %v63, 0.0
    %113 = vadd.xlane.f32.xlu0 %v112
    %v114 = vpop.xlane.xlu0 %113
    %v115 = vsel %vm87, %v64, 0.0
    %116 = vadd.xlane.f32.xlu0 %v115
    %v117 = vpop.xlane.xlu0 %116
    %v118 = vsel %vm87, %v65, 0.0
    %119 = vadd.xlane.f32.xlu0 %v118
    %v120 = vpop.xlane.xlu0 %119
    %v121 = vsel %vm87, %v66, 0.0
    %122 = vadd.xlane.f32.xlu0 %v121
    %v123 = vpop.xlane.xlu0 %122
    %v124 = vsel %vm87, %v67, 0.0
    %125 = vadd.xlane.f32.xlu0 %v124
    %v126 = vpop.xlane.xlu0 %125
    %v127 = vsel %vm87, %v68, 0.0
    %128 = vadd.xlane.f32.xlu0 %v127
    %v129 = vpop.xlane.xlu0 %128
    %v130 = vsel %vm87, %v69, 0.0
    %131 = vadd.xlane.f32.xlu0 %v130
    %v132 = vpop.xlane.xlu0 %131
    %v133 = vsel %vm87, %v70, 0.0
    %134 = vadd.xlane.f32.xlu0 %v133
    %v135 = vpop.xlane.xlu0 %134
    %v136 = vsel %vm87, %v71, 0.0
    %137 = vadd.xlane.f32.xlu0 %v136
    %v138 = vpop.xlane.xlu0 %137
    %v139 = vsel %vm87, %v72, 0.0
    %140 = vadd.xlane.f32.xlu0 %v139
    %v141 = vpop.xlane.xlu0 %140
    %v142 = vsel %vm87, %v73, 0.0
    %143 = vadd.xlane.f32.xlu0 %v142
    %v144 = vpop.xlane.xlu0 %143
    %v145 = vsel %vm87, %v74, 0.0
    %146 = vadd.xlane.f32.xlu0 %v145
    %v147 = vpop.xlane.xlu0 %146
    %v148 = vsel %vm87, %v75, 0.0
    %149 = vadd.xlane.f32.xlu0 %v148
    %v150 = vpop.xlane.xlu0 %149
    %v151 = vsel %vm87, %v76, 0.0
    %152 = vadd.xlane.f32.xlu0 %v151
    %v153 = vpop.xlane.xlu0 %152
    %v154 = vsel %vm87, %v77, 0.0
    %155 = vadd.xlane.f32.xlu0 %v154
    %v156 = vpop.xlane.xlu0 %155
    %v157 = vsel %vm87, %v78, 0.0
    %158 = vadd.xlane.f32.xlu0 %v157
    %v159 = vpop.xlane.xlu0 %158
    %v160 = vsel %vm87, %v79, 0.0
    %161 = vadd.xlane.f32.xlu0 %v160
    %v162 = vpop.xlane.xlu0 %161
    %v163 = vsel %vm87, %v80, 0.0
    %164 = vadd.xlane.f32.xlu0 %v163
    %v165 = vpop.xlane.xlu0 %164
    %v166 = vsel %vm87, %v81, 0.0
    %167 = vadd.xlane.f32.xlu0 %v166
    %v168 = vpop.xlane.xlu0 %167
    %v169 = vsel %vm87, %v82, 0.0
    %170 = vadd.xlane.f32.xlu0 %v169
    %v171 = vpop.xlane.xlu0 %170
    %v172 = vsel %vm87, %v83, 0.0
    %173 = vadd.xlane.f32.xlu0 %v172
    %v174 = vpop.xlane.xlu0 %173
    %v175 = vsel %vm87, %v84, 0.0
    %176 = vadd.xlane.f32.xlu0 %v175
    %v177 = vpop.xlane.xlu0 %176
    %v178 = vsel %vm87, %v85, 0.0
    %179 = vadd.xlane.f32.xlu0 %v178
    %v180 = vpop.xlane.xlu0 %179
    %v181 = vsel %vm87, %v86, 0.0
    %182 = vadd.xlane.f32.xlu0 %v181
    %v183 = vpop.xlane.xlu0 %182
    %v184 = vpack.c.bf16 %v93, %v90
    %v185 = vpack.c.bf16 %v99, %v96
    %v186 = vpack.c.bf16 %v105, %v102
    %v187 = vpack.c.bf16 %v111, %v108
    %v188 = vpack.c.bf16 %v117, %v114
    %v189 = vpack.c.bf16 %v123, %v120
    %v190 = vpack.c.bf16 %v129, %v126
    %v191 = vpack.c.bf16 %v135, %v132
    %v192 = vpack.c.bf16 %v141, %v138
    %v193 = vpack.c.bf16 %v147, %v144
    %v194 = vpack.c.bf16 %v153, %v150
    %v195 = vpack.c.bf16 %v159, %v156
    %v196 = vpack.c.bf16 %v165, %v162
    %v197 = vpack.c.bf16 %v171, %v168
    %v198 = vpack.c.bf16 %v177, %v174
    %v199 = vpack.c.bf16 %v183, %v180
    %v200 = vld [vmem:[#allocation5] sm:$0xf]
    %v201 = vld [vmem:[#allocation5 + $0x4] sm:$0xf]
    %v202 = vld [vmem:[#allocation5 + $0x8] sm:$0xf]
    %v203 = vld [vmem:[#allocation5 + $0xc] sm:$0xf]
    %v204 = vld [vmem:[#allocation5 + $0x10] sm:$0xf]
    %v205 = vld [vmem:[#allocation5 + $0x14] sm:$0xf]
    %v206 = vld [vmem:[#allocation5 + $0x18] sm:$0xf]
    %v207 = vld [vmem:[#allocation5 + $0x1c] sm:$0xf]
    %v208 = vld [vmem:[#allocation5 + $0x20] sm:$0xf]
    %v209 = vld [vmem:[#allocation5 + $0x24] sm:$0xf]
    %v210 = vld [vmem:[#allocation5 + $0x28] sm:$0xf]
    %v211 = vld [vmem:[#allocation5 + $0x2c] sm:$0xf]
    %v212 = vld [vmem:[#allocation5 + $0x30] sm:$0xf]
    %v213 = vld [vmem:[#allocation5 + $0x34] sm:$0xf]
    %v214 = vld [vmem:[#allocation5 + $0x38] sm:$0xf]
    %v215 = vld [vmem:[#allocation5 + $0x3c] sm:$0xf]
    %v216 = vld [vmem:[#allocation7] sm:$0x1]
    %v218 = vlaneseq
    %v219 = vshrl.u32 %v218, 7
    %v220 = vsub.s32 0, %v219
    %v221 = vrot.slane %v216, %v220
    %v239 = vunpack.c.l.b16 %v184
    %v240 = vunpack.c.h.b16 %v184
    %v241 = vunpack.c.l.b16 %v185
    %v242 = vunpack.c.h.b16 %v185
    %v243 = vunpack.c.l.b16 %v186
    %v244 = vunpack.c.h.b16 %v186
    %v245 = vunpack.c.l.b16 %v187
    %v246 = vunpack.c.h.b16 %v187
    %v247 = vunpack.c.l.b16 %v188
    %v248 = vunpack.c.h.b16 %v188
    %v249 = vunpack.c.l.b16 %v189
    %v250 = vunpack.c.h.b16 %v189
    %v251 = vunpack.c.l.b16 %v190
    %v252 = vunpack.c.h.b16 %v190
    %v253 = vunpack.c.l.b16 %v191
    %v254 = vunpack.c.h.b16 %v191
    %v255 = vunpack.c.l.b16 %v192
    %v256 = vunpack.c.h.b16 %v192
    %v257 = vunpack.c.l.b16 %v193
    %v258 = vunpack.c.h.b16 %v193
    %v259 = vunpack.c.l.b16 %v194
    %v260 = vunpack.c.h.b16 %v194
    %v261 = vunpack.c.l.b16 %v195
    %v262 = vunpack.c.h.b16 %v195
    %v263 = vunpack.c.l.b16 %v196
    %v264 = vunpack.c.h.b16 %v196
    %v265 = vunpack.c.l.b16 %v197
    %v266 = vunpack.c.h.b16 %v197
    %v267 = vunpack.c.l.b16 %v198
    %v268 = vunpack.c.h.b16 %v198
    %v269 = vunpack.c.l.b16 %v199
    %v270 = vunpack.c.h.b16 %v199
    %v271 = vlaneseq
    %v272 = vand.u32 %v271, 127
    %v273 = vlaneseq
    %v274 = vshrl.u32 %v273, 7
    %v275 = vsub.s32 %v272, %v274
    %v276 = vrot.slane %v239, %v275
    %v277 = vadd.s32 %v272, 4294967288
    %v278 = vlaneseq
    %v279 = vshrl.u32 %v278, 7
    %v280 = vsub.s32 %v277, %v279
    %v281 = vrot.slane %v240, %v280
    %vm282 = vcmask 130112
    %v283 = vsel %vm282, %v281, %v276
    %v284 = vadd.s32 %v272, 4294967280
    %v285 = vlaneseq
    %v286 = vshrl.u32 %v285, 7
    %v287 = vsub.s32 %v284, %v286
    %v288 = vrot.slane %v241, %v287
    %vm289 = vcmask 195712
    %v290 = vsel %vm289, %v288, %v283
    %v291 = vadd.s32 %v272, 4294967272
    %v292 = vlaneseq
    %v293 = vshrl.u32 %v292, 7
    %v294 = vsub.s32 %v291, %v293
    %v295 = vrot.slane %v242, %v294
    %vm296 = vcmask 261312
    %v297 = vsel %vm296, %v295, %v290
    %v298 = vadd.s32 %v272, 4294967264
    %v299 = vlaneseq
    %v300 = vshrl.u32 %v299, 7
    %v301 = vsub.s32 %v298, %v300
    %v302 = vrot.slane %v243, %v301
    %vm303 = vcmask 326912
    %v304 = vsel %vm303, %v302, %v297
    %v305 = vadd.s32 %v272, 4294967256
    %v306 = vlaneseq
    %v307 = vshrl.u32 %v306, 7
    %v308 = vsub.s32 %v305, %v307
    %v309 = vrot.slane %v244, %v308
    %vm310 = vcmask 392512
    %v311 = vsel %vm310, %v309, %v304
    %v312 = vadd.s32 %v272, 4294967248
    %v313 = vlaneseq
    %v314 = vshrl.u32 %v313, 7
    %v315 = vsub.s32 %v312, %v314
    %v316 = vrot.slane %v245, %v315
    %vm317 = vcmask 458112
    %v318 = vsel %vm317, %v316, %v311
    %v319 = vadd.s32 %v272, 4294967240
    %v320 = vlaneseq
    %v321 = vshrl.u32 %v320, 7
    %v322 = vsub.s32 %v319, %v321
    %v323 = vrot.slane %v246, %v322
    %vm324 = vcmask 523712
    %v325 = vsel %vm324, %v323, %v318
    %v326 = vadd.s32 %v272, 4294967232
    %v327 = vlaneseq
    %v328 = vshrl.u32 %v327, 7
    %v329 = vsub.s32 %v326, %v328
    %v330 = vrot.slane %v247, %v329
    %vm331 = vcmask 589312
    %v332 = vsel %vm331, %v330, %v325
    %v333 = vadd.s32 %v272, 4294967224
    %v334 = vlaneseq
    %v335 = vshrl.u32 %v334, 7
    %v336 = vsub.s32 %v333, %v335
    %v337 = vrot.slane %v248, %v336
    %vm338 = vcmask 654912
    %v339 = vsel %vm338, %v337, %v332
    %v340 = vadd.s32 %v272, 4294967216
    %v341 = vlaneseq
    %v342 = vshrl.u32 %v341, 7
    %v343 = vsub.s32 %v340, %v342
    %v344 = vrot.slane %v249, %v343
    %vm345 = vcmask 720512
    %v346 = vsel %vm345, %v344, %v339
    %v347 = vadd.s32 %v272, 4294967208
    %v348 = vlaneseq
    %v349 = vshrl.u32 %v348, 7
    %v350 = vsub.s32 %v347, %v349
    %v351 = vrot.slane %v250, %v350
    %vm352 = vcmask 786112
    %v353 = vsel %vm352, %v351, %v346
    %v354 = vadd.s32 %v272, 4294967200
    %v355 = vlaneseq
    %v356 = vshrl.u32 %v355, 7
    %v357 = vsub.s32 %v354, %v356
    %v358 = vrot.slane %v251, %v357
    %vm359 = vcmask 851712
    %v360 = vsel %vm359, %v358, %v353
    %v361 = vadd.s32 %v272, 4294967192
    %v362 = vlaneseq
    %v363 = vshrl.u32 %v362, 7
    %v364 = vsub.s32 %v361, %v363
    %v365 = vrot.slane %v252, %v364
    %vm366 = vcmask 917312
    %v367 = vsel %vm366, %v365, %v360
    %v368 = vadd.s32 %v272, 4294967184
    %v369 = vlaneseq
    %v370 = vshrl.u32 %v369, 7
    %v371 = vsub.s32 %v368, %v370
    %v372 = vrot.slane %v253, %v371
    %vm373 = vcmask 982912
    %v374 = vsel %vm373, %v372, %v367
    %v375 = vadd.s32 %v272, 4294967176
    %v376 = vlaneseq
    %v377 = vshrl.u32 %v376, 7
    %v378 = vsub.s32 %v375, %v377
    %v379 = vrot.slane %v254, %v378
    %vm380 = vcmask 1048512
    %v381 = vsel %vm380, %v379, %v374
    %v382 = vlaneseq
    %v383 = vshrl.u32 %v382, 7
    %v384 = vsub.s32 %v272, %v383
    %v385 = vrot.slane %v255, %v384
    %v386 = vlaneseq
    %v387 = vshrl.u32 %v386, 7
    %v388 = vsub.s32 %v277, %v387
    %v389 = vrot.slane %v256, %v388
    %v390 = vsel %vm282, %v389, %v385
    %v391 = vlaneseq
    %v392 = vshrl.u32 %v391, 7
    %v393 = vsub.s32 %v284, %v392
    %v394 = vrot.slane %v257, %v393
    %v395 = vsel %vm289, %v394, %v390
    %v396 = vlaneseq
    %v397 = vshrl.u32 %v396, 7
    %v398 = vsub.s32 %v291, %v397
    %v399 = vrot.slane %v258, %v398
    %v400 = vsel %vm296, %v399, %v395
    %v401 = vlaneseq
    %v402 = vshrl.u32 %v401, 7
    %v403 = vsub.s32 %v298, %v402
    %v404 = vrot.slane %v259, %v403
    %v405 = vsel %vm303, %v404, %v400
    %v406 = vlaneseq
    %v407 = vshrl.u32 %v406, 7
    %v408 = vsub.s32 %v305, %v407
    %v409 = vrot.slane %v260, %v408
    %v410 = vsel %vm310, %v409, %v405
    %v411 = vlaneseq
    %v412 = vshrl.u32 %v411, 7
    %v413 = vsub.s32 %v312, %v412
    %v414 = vrot.slane %v261, %v413
    %v415 = vsel %vm317, %v414, %v410
    %v416 = vlaneseq
    %v417 = vshrl.u32 %v416, 7
    %v418 = vsub.s32 %v319, %v417
    %v419 = vrot.slane %v262, %v418
    %v420 = vsel %vm324, %v419, %v415
    %v421 = vlaneseq
    %v422 = vshrl.u32 %v421, 7
    %v423 = vsub.s32 %v326, %v422
    %v424 = vrot.slane %v263, %v423
    %v425 = vsel %vm331, %v424, %v420
    %v426 = vlaneseq
    %v427 = vshrl.u32 %v426, 7
    %v428 = vsub.s32 %v333, %v427
    %v429 = vrot.slane %v264, %v428
    %v430 = vsel %vm338, %v429, %v425
    %v431 = vlaneseq
    %v432 = vshrl.u32 %v431, 7
    %v433 = vsub.s32 %v340, %v432
    %v434 = vrot.slane %v265, %v433
    %v435 = vsel %vm345, %v434, %v430
    %v436 = vlaneseq
    %v437 = vshrl.u32 %v436, 7
    %v438 = vsub.s32 %v347, %v437
    %v439 = vrot.slane %v266, %v438
    %v440 = vsel %vm352, %v439, %v435
    %v441 = vlaneseq
    %v442 = vshrl.u32 %v441, 7
    %v443 = vsub.s32 %v354, %v442
    %v444 = vrot.slane %v267, %v443
    %v445 = vsel %vm359, %v444, %v440
    %v446 = vlaneseq
    %v447 = vshrl.u32 %v446, 7
    %v448 = vsub.s32 %v361, %v447
    %v449 = vrot.slane %v268, %v448
    %v450 = vsel %vm366, %v449, %v445
    %v451 = vlaneseq
    %v452 = vshrl.u32 %v451, 7
    %v453 = vsub.s32 %v368, %v452
    %v454 = vrot.slane %v269, %v453
    %v455 = vsel %vm373, %v454, %v450
    %v456 = vlaneseq
    %v457 = vshrl.u32 %v456, 7
    %v458 = vsub.s32 %v375, %v457
    %v459 = vrot.slane %v270, %v458
    %v460 = vsel %vm380, %v459, %v455
    %vm461 = vcmask 1041409
    %v462 = vsel %vm461, %v460, %v381
    %v463 = vpack.c.b16 %v462, %v462
    %v481 = vunpack.c.l.b16 %v200
    %v482 = vunpack.c.l.b16 %v201
    %v483 = vunpack.c.l.b16 %v202
    %v484 = vunpack.c.l.b16 %v203
    %v485 = vunpack.c.l.b16 %v204
    %v486 = vunpack.c.l.b16 %v205
    %v487 = vunpack.c.l.b16 %v206
    %v488 = vunpack.c.l.b16 %v207
    %v489 = vunpack.c.l.b16 %v208
    %v490 = vunpack.c.l.b16 %v209
    %v491 = vunpack.c.l.b16 %v210
    %v492 = vunpack.c.l.b16 %v211
    %v493 = vunpack.c.l.b16 %v212
    %v494 = vunpack.c.l.b16 %v213
    %v495 = vunpack.c.l.b16 %v214
    %v496 = vunpack.c.l.b16 %v215
    %v497 = vpack.c.b16 %v482, %v481
    %v498 = vpack.c.b16 %v484, %v483
    %v499 = vpack.c.b16 %v486, %v485
    %v500 = vpack.c.b16 %v488, %v487
    %v501 = vpack.c.b16 %v490, %v489
    %v502 = vpack.c.b16 %v492, %v491
    %v503 = vpack.c.b16 %v494, %v493
    %v504 = vpack.c.b16 %v496, %v495
    %513 = vmatprep.subr.bf16.mxu0 0
    %514 = vmatpush1.bf16.msra.mxu0 %v497
    %515 = vmatprep.subr.bf16.mxu0 0
    %516 = vmatpush1.bf16.msra.mxu0 %v498
    %517 = vmatprep.subr.bf16.mxu0 0
    %518 = vmatpush1.bf16.msra.mxu0 %v499
    %519 = vmatprep.subr.bf16.mxu0 0
    %520 = vmatpush1.bf16.msra.mxu0 %v500
    %521 = vmatprep.subr.bf16.mxu0 0
    %522 = vmatpush1.bf16.msra.mxu0 %v501
    %523 = vmatprep.subr.bf16.mxu0 0
    %524 = vmatpush1.bf16.msra.mxu0 %v502
    %525 = vmatprep.subr.bf16.mxu0 0
    %526 = vmatpush1.bf16.msra.mxu0 %v503
    %527 = vmatprep.subr.bf16.mxu0 0
    %528 = vmatpush1.bf16.msra.mxu0 %v504
    %529 = vmatprep.subr.bf16.mxu0 0
    %530 = vmatpush1.bf16.msra.mxu0 0
    %531 = vmatprep.subr.bf16.mxu0 0
    %532 = vmatpush1.bf16.msra.mxu0 0
    %533 = vmatprep.subr.bf16.mxu0 0
    %534 = vmatpush1.bf16.msra.mxu0 0
    %535 = vmatprep.subr.bf16.mxu0 0
    %536 = vmatpush1.bf16.msra.mxu0 0
    %537 = vmatprep.subr.bf16.mxu0 0
    %538 = vmatpush1.bf16.msra.mxu0 0
    %539 = vmatprep.subr.bf16.mxu0 0
    %540 = vmatpush1.bf16.msra.mxu0 0
    %541 = vmatprep.subr.bf16.mxu0 0
    %542 = vmatpush1.bf16.msra.mxu0 0
    %543 = vmatprep.subr.bf16.mxu0 0
    %544 = vmatpush1.bf16.msra.mxu0 0
    %545 = vmatprep.mubr.bf16.mxu0 0
    %546 = vmatmul.mubr.bf16.gmra.mrb[0].mxu0 %v463
    %v547 = vpop.f32.mrb[0].mxu0
    %v548 = vadd.f32 %v221, %v547
    %v549 = vpop.f32.mrb[0].mxu0
    %v550 = vpop.f32.mrb[0].mxu0
    %v551 = vpop.f32.mrb[0].mxu0
    %552 = vdwg.mxu0
    %553 = vst [vmem:[#allocation8] sm:$0x3] %v548
    // Predicated region
    $region26: #{tpu_custom_call.1} parent=1 // pred_check
      _
    $region27: #{tpu_custom_call.1} parent=1 // pred_check_branch
      %555 = sbr.rel (0) target = $region29
    $region28: #{tpu_custom_call.1} parent=1 // pred_region
      %s557 = ssub.s32 32, 32
      %558 = vsyncadd [#allocation4], %s557
      %s560 = sshll.u32 [#allocation8], 4
      %s561 = int_to_ptr.vmem [resolvable:$true] %s560
      %563 = dma.vmem_to_hbm [thread:$0]  %s561, 32, %s3, [#allocation4]
    $region29: #{tpu_custom_call.1} parent=1 // pred_fallthru
      _
    // Predicated region
    $region30: #{tpu_custom_call.1} parent=1 // pred_check
      _
    $region31: #{tpu_custom_call.1} parent=1 // pred_check_branch
      %565 = sbr.rel (0) target = $region33
    $region32: #{tpu_custom_call.1} parent=1 // pred_region
      %566 = dma.done [#allocation4], 32
    $region33: #{tpu_custom_call.1} parent=1 // pred_fallthru
      _
    %567 = vsyncpa [#allocation3], 1
    %568 = vsyncpa [#allocation6], 1
    %569 = vsyncpa [#allocation4], 1

</llo_original>
